<compile_context>
chip_gen: v5e
topology: v5e:2x2
jax: 0.10.0
libtpu: 0.0.40
codegen_flags: <defaults>
</compile_context>

<pallas_src>
import functools

import jax
import jax.numpy as jnp
from jax.experimental import pallas as pl

EPS = 1e-5  # nn.BatchNorm2d default


def _conv_bn_relu_kernel(x_ref, w_ref, sdown_ref, sup_ref, red_ref, bc_ref,
                         g_ref, b_ref, o_ref, *, n_total):
    """Fused 3x3 conv + training-mode BatchNorm + ReLU for the whole batch.

    Shapes (M = N*H, output lanes packed as w*Cout + cout):
      x_ref     : (M, W*Cin)        lane-packed NHWC activation rows
      w_ref     : (W*Cin, 3*W*Cout) block-Toeplitz weight, vertical-tap (dy)
                                    major chunks; horizontal taps + horizontal
                                    zero padding folded into each chunk
      sdown_ref : (M, M)            0/1 shift: row r <- row r-1 (0 where h==0)
      sup_ref   : (M, M)            0/1 shift: row r <- row r+1 (0 where h==H-1)
      red_ref   : (W*Cout, Cout)    per-channel lane-sum matrix
      bc_ref    : (Cout, W*Cout)    per-channel lane-broadcast matrix
      g_ref     : (1, W*Cout)       gamma tiled to the lane pattern
      b_ref     : (1, W*Cout)       beta  tiled to the lane pattern
      o_ref     : (M, W*Cout)       output rows (lane-dense, unmasked stores)
    """
    wco = o_ref.shape[1]

    # One MXU matmul produces all three vertical-tap partial convolutions.
    a = jnp.dot(x_ref[...], w_ref[...],
                preferred_element_type=jnp.float32)            # (M, 3*W*Cout)
    a_top = a[:, :wco]            # contribution of kernel row ky = 0
    a_mid = a[:, wco:2 * wco]     # ky = 1
    a_bot = a[:, 2 * wco:]        # ky = 2

    # Vertical taps: out[h] = a_top[h-1] + a_mid[h] + a_bot[h+1].  The 0/1
    # shift matrices implement the row shift, the vertical zero padding and
    # the cross-image masking in one tiny MXU matmul each (no rolls, no
    # padded scratch, no cross-image bleed).
    conv = (jnp.dot(sdown_ref[...], a_top, preferred_element_type=jnp.float32)
            + a_mid
            + jnp.dot(sup_ref[...], a_bot, preferred_element_type=jnp.float32))
    # NOTE: conv bias omitted -- training-mode BN mean subtraction cancels it.

    # Exact two-pass BatchNorm statistics.  The skinny 0/1 matmuls reduce the
    # per-(w, c) lane sums to per-channel totals and broadcast them back to
    # the lane pattern without any cross-lane shuffles.
    sum_lane = jnp.sum(conv, axis=0, keepdims=True)                     # (1, W*Cout)
    mean = jnp.dot(jnp.dot(sum_lane, red_ref[...]), bc_ref[...]) / n_total
    centered = conv - mean
    sq_lane = jnp.sum(centered * centered, axis=0, keepdims=True)
    var = jnp.dot(jnp.dot(sq_lane, red_ref[...]), bc_ref[...]) / n_total
    scale = g_ref[...] * jax.lax.rsqrt(var + EPS)
    o_ref[...] = jnp.maximum(centered * scale + b_ref[...], 0.0).astype(o_ref.dtype)


def conv_relu_bn(x_nchw, w_oihw, bias, gamma, beta):
    """Forward of Conv_ReLU_BN: Conv2d(3x3,s1,p1) -> BatchNorm2d(training) -> ReLU."""
    N, Cin, H, W = x_nchw.shape
    Cout, cin_w, kh, kw = w_oihw.shape
    assert (cin_w, kh, kw) == (Cin, 3, 3)
    # Conv bias accepted for interface parity but unused: with training-mode
    # (batch-statistics) BatchNorm it is exactly cancelled by the mean
    # subtraction.  NOT valid for eval-mode running statistics.
    del bias

    M = N * H
    WCi, WCo = W * Cin, W * Cout
    f32 = jnp.float32

    # Single-block layout assumptions (hold for the spec shapes: 2x4x16x16 -> 8ch).
    # TODO(synk): for larger shapes, pad W*Cout to a multiple of 128, tile the
    # row dimension over a grid and stream the BN stats into a finalize step.
    assert M % 8 == 0, "row count must be a multiple of 8 sublanes"
    assert WCo % 128 == 0, "packed output row must be lane-dense (multiple of 128)"

    # Lane-dense activation packing: one transpose + reshape (NCHW -> rows).
    x_rows = jnp.transpose(x_nchw, (0, 2, 3, 1)).reshape(M, WCi).astype(f32)

    # Block-Toeplitz weight: for each vertical tap ky, fold the three
    # horizontal taps (and horizontal zero padding) into a (W*Cin, W*Cout)
    # matrix; concatenate the three chunks along lanes (ky-major).
    #   T[ky][w_in*Cin + ci, w_out*Cout + co] = w[co, ci, ky, w_in - w_out + 1]
    w_k = jnp.transpose(w_oihw, (2, 3, 1, 0)).astype(f32)        # (ky, kx, ci, co)
    w_in = jnp.arange(W)[:, None]
    w_out = jnp.arange(W)[None, :]
    kx = w_in - w_out + 1                                        # (W_in, W_out)
    valid = ((kx >= 0) & (kx <= 2)).astype(f32)                  # horizontal zero pad
    taps = w_k[:, jnp.clip(kx, 0, 2), :, :]                      # (3, W_in, W_out, Cin, Cout)
    taps = taps * valid[None, :, :, None, None]
    w_cat = jnp.transpose(taps, (1, 3, 0, 2, 4)).reshape(WCi, 3 * WCo)

    # Vertical-tap 0/1 shift matrices: row shift + vertical zero padding +
    # image-boundary masking, applied on the MXU inside the kernel.
    r = jnp.arange(M)
    h = r % H
    s_down = ((r[:, None] - 1 == r[None, :]) & (h[:, None] != 0)).astype(f32)
    s_up = ((r[:, None] + 1 == r[None, :]) & (h[:, None] != H - 1)).astype(f32)

    # Skinny per-channel reduce / broadcast matrices (replace the dense
    # (W*Cout, W*Cout) matrix flagged in review).
    eye_c = jnp.eye(Cout, dtype=f32)
    red = jnp.tile(eye_c, (W, 1))        # (W*Cout, Cout)
    bc = jnp.tile(eye_c, (1, W))         # (Cout, W*Cout)

    gamma_t = jnp.tile(gamma.reshape(1, Cout).astype(f32), (1, W))
    beta_t = jnp.tile(beta.reshape(1, Cout).astype(f32), (1, W))

    kernel = functools.partial(_conv_bn_relu_kernel, n_total=float(N * H * W))
    # No grid / no BlockSpecs: every operand is a whole-array VMEM block
    # (total footprint < 200 KiB), so this is a single pipelined invocation.
    out_rows = pl.pallas_call(
        kernel,
        out_shape=jax.ShapeDtypeStruct((M, WCo), f32),
    )(x_rows, w_cat, s_down, s_up, red, bc, gamma_t, beta_t)

    return jnp.transpose(out_rows.reshape(N, H, W, Cout), (0, 3, 1, 2))


def _reference(x_nchw, w_oihw, bias, gamma, beta):
    """Pure-JAX reference (conv + training-mode BN + ReLU), WITH conv bias."""
    out = jax.lax.conv_general_dilated(
        x_nchw.astype(jnp.float32),
        w_oihw.astype(jnp.float32),
        window_strides=(1, 1),
        padding=((1, 1), (1, 1)),
        dimension_numbers=("NCHW", "OIHW", "NCHW"),
        precision=jax.lax.Precision.HIGHEST,
    ) + bias.reshape(1, -1, 1, 1)
    mean = jnp.mean(out, axis=(0, 2, 3), keepdims=True)
    var = jnp.mean((out - mean) ** 2, axis=(0, 2, 3), keepdims=True)
    y = (out - mean) * jax.lax.rsqrt(var + EPS)
    y = y * gamma.reshape(1, -1, 1, 1) + beta.reshape(1, -1, 1, 1)
    return jnp.maximum(y, 0.0)


if __name__ == "__main__":
    # Small shapes consistent with the module: in_c=4, out_c=8, 16x16 spatial.
    N, IN_C, OUT_C, H, W = 2, 4, 8, 16, 16

    key = jax.random.PRNGKey(0)
    kx, kw, kb, kg, kbe = jax.random.split(key, 5)

    x = jax.random.normal(kx, (N, IN_C, H, W), dtype=jnp.float32)
    # Deterministic synthetic parameters (not loading a checkpoint).
    w = jax.random.normal(kw, (OUT_C, IN_C, 3, 3), dtype=jnp.float32) * 0.1
    b = jax.random.normal(kb, (OUT_C,), dtype=jnp.float32) * 0.1
    gamma = 1.0 + 0.1 * jax.random.normal(kg, (OUT_C,), dtype=jnp.float32)
    beta = 0.1 * jax.random.normal(kbe, (OUT_C,), dtype=jnp.float32)

    out = jax.jit(conv_relu_bn)(x, w, b, gamma, beta)
    out = jax.block_until_ready(out)

    ref = _reference(x, w, b, gamma, beta)
    assert out.shape == (N, OUT_C, H, W), out.shape
    max_err = float(jnp.max(jnp.abs(out - ref)))
    # Expected error ~1e-6 (both paths full-f32); 1e-3 leaves margin for MXU
    # f32 pass-count differences across generations while still catching any
    # tap/padding/statistics logic error (those are O(0.1) or larger).
    assert jnp.allclose(out, ref, atol=1e-3, rtol=1e-3), max_err
    print("KERNEL_OK")
</pallas_src>

<mosaic_0001>
module attributes {stable_mosaic.version = 11 : i64} {
  func.func @_conv_bn_relu_kernel(%arg0: memref<32x64xf32, #tpu.memory_space<vmem>>, %arg1: memref<64x384xf32, #tpu.memory_space<vmem>>, %arg2: memref<32x32xf32, #tpu.memory_space<vmem>>, %arg3: memref<32x32xf32, #tpu.memory_space<vmem>>, %arg4: memref<128x8xf32, #tpu.memory_space<vmem>>, %arg5: memref<8x128xf32, #tpu.memory_space<vmem>>, %arg6: memref<1x128xf32, #tpu.memory_space<vmem>>, %arg7: memref<1x128xf32, #tpu.memory_space<vmem>>, %arg8: memref<32x128xf32, #tpu.memory_space<vmem>>) attributes {dimension_semantics = [], scalar_prefetch = 0 : i64, scratch_operands = 0 : i64, tpu.core_type = #tpu.core_type<tc>} {
    %c0 = arith.constant 0 : index
    %c0_0 = arith.constant 0 : index
    %0 = vector.load %arg0[%c0, %c0_0] : memref<32x64xf32, #tpu.memory_space<vmem>>, vector<32x64xf32>
    %c0_1 = arith.constant 0 : index
    %c0_2 = arith.constant 0 : index
    %1 = vector.load %arg1[%c0_1, %c0_2] : memref<64x384xf32, #tpu.memory_space<vmem>>, vector<64x384xf32>
    %cst = arith.constant dense<0.000000e+00> : vector<32x384xf32>
    %2 = tpu.matmul %0, %1, %cst {dimension_numbers = #tpu.dot_dimension_numbers<[1], [0], [0], [1], [0, 0, 1, 1], [], []>} : vector<32x64xf32>, vector<64x384xf32>, vector<32x384xf32> -> vector<32x384xf32>
    %3 = vector.extract_strided_slice %2 {offsets = [0, 0], sizes = [32, 128], strides = [1, 1]} : vector<32x384xf32> to vector<32x128xf32>
    %4 = vector.extract_strided_slice %2 {offsets = [0, 128], sizes = [32, 128], strides = [1, 1]} : vector<32x384xf32> to vector<32x128xf32>
    %5 = vector.extract_strided_slice %2 {offsets = [0, 256], sizes = [32, 128], strides = [1, 1]} : vector<32x384xf32> to vector<32x128xf32>
    %c0_3 = arith.constant 0 : index
    %c0_4 = arith.constant 0 : index
    %6 = vector.load %arg2[%c0_3, %c0_4] : memref<32x32xf32, #tpu.memory_space<vmem>>, vector<32x32xf32>
    %cst_5 = arith.constant dense<0.000000e+00> : vector<32x128xf32>
    %7 = tpu.matmul %6, %3, %cst_5 {dimension_numbers = #tpu.dot_dimension_numbers<[1], [0], [0], [1], [0, 0, 1, 1], [], []>} : vector<32x32xf32>, vector<32x128xf32>, vector<32x128xf32> -> vector<32x128xf32>
    %8 = arith.addf %7, %4 : vector<32x128xf32>
    %c0_6 = arith.constant 0 : index
    %c0_7 = arith.constant 0 : index
    %9 = vector.load %arg3[%c0_6, %c0_7] : memref<32x32xf32, #tpu.memory_space<vmem>>, vector<32x32xf32>
    %cst_8 = arith.constant dense<0.000000e+00> : vector<32x128xf32>
    %10 = tpu.matmul %9, %5, %cst_8 {dimension_numbers = #tpu.dot_dimension_numbers<[1], [0], [0], [1], [0, 0, 1, 1], [], []>} : vector<32x32xf32>, vector<32x128xf32>, vector<32x128xf32> -> vector<32x128xf32>
    %11 = arith.addf %8, %10 : vector<32x128xf32>
    %cst_9 = arith.constant dense<0.000000e+00> : vector<128xf32>
    %12 = vector.multi_reduction <add>, %11, %cst_9 [0] : vector<32x128xf32> to vector<128xf32>
    %13 = vector.shape_cast %12 : vector<128xf32> to vector<1x128xf32>
    %c0_10 = arith.constant 0 : index
    %c0_11 = arith.constant 0 : index
    %14 = vector.load %arg4[%c0_10, %c0_11] : memref<128x8xf32, #tpu.memory_space<vmem>>, vector<128x8xf32>
    %cst_12 = arith.constant dense<0.000000e+00> : vector<1x8xf32>
    %15 = tpu.matmul %13, %14, %cst_12 {dimension_numbers = #tpu.dot_dimension_numbers<[1], [0], [0], [1], [0, 0, 1, 1], [], []>} : vector<1x128xf32>, vector<128x8xf32>, vector<1x8xf32> -> vector<1x8xf32>
    %c0_13 = arith.constant 0 : index
    %c0_14 = arith.constant 0 : index
    %16 = vector.load %arg5[%c0_13, %c0_14] : memref<8x128xf32, #tpu.memory_space<vmem>>, vector<8x128xf32>
    %cst_15 = arith.constant dense<0.000000e+00> : vector<1x128xf32>
    %17 = tpu.matmul %15, %16, %cst_15 {dimension_numbers = #tpu.dot_dimension_numbers<[1], [0], [0], [1], [0, 0, 1, 1], [], []>} : vector<1x8xf32>, vector<8x128xf32>, vector<1x128xf32> -> vector<1x128xf32>
    %cst_16 = arith.constant 5.120000e+02 : f32
    %18 = vector.broadcast %cst_16 : f32 to vector<1x128xf32>
    %19 = arith.divf %17, %18 : vector<1x128xf32>
    %20 = vector.broadcast %19 : vector<1x128xf32> to vector<32x128xf32>
    %21 = arith.subf %11, %20 : vector<32x128xf32>
    %22 = arith.mulf %21, %21 : vector<32x128xf32>
    %cst_17 = arith.constant dense<0.000000e+00> : vector<128xf32>
    %23 = vector.multi_reduction <add>, %22, %cst_17 [0] : vector<32x128xf32> to vector<128xf32>
    %24 = vector.shape_cast %23 : vector<128xf32> to vector<1x128xf32>
    %c0_18 = arith.constant 0 : index
    %c0_19 = arith.constant 0 : index
    %25 = vector.load %arg4[%c0_18, %c0_19] : memref<128x8xf32, #tpu.memory_space<vmem>>, vector<128x8xf32>
    %cst_20 = arith.constant dense<0.000000e+00> : vector<1x8xf32>
    %26 = tpu.matmul %24, %25, %cst_20 {dimension_numbers = #tpu.dot_dimension_numbers<[1], [0], [0], [1], [0, 0, 1, 1], [], []>} : vector<1x128xf32>, vector<128x8xf32>, vector<1x8xf32> -> vector<1x8xf32>
    %c0_21 = arith.constant 0 : index
    %c0_22 = arith.constant 0 : index
    %27 = vector.load %arg5[%c0_21, %c0_22] : memref<8x128xf32, #tpu.memory_space<vmem>>, vector<8x128xf32>
    %cst_23 = arith.constant dense<0.000000e+00> : vector<1x128xf32>
    %28 = tpu.matmul %26, %27, %cst_23 {dimension_numbers = #tpu.dot_dimension_numbers<[1], [0], [0], [1], [0, 0, 1, 1], [], []>} : vector<1x8xf32>, vector<8x128xf32>, vector<1x128xf32> -> vector<1x128xf32>
    %cst_24 = arith.constant 5.120000e+02 : f32
    %29 = vector.broadcast %cst_24 : f32 to vector<1x128xf32>
    %30 = arith.divf %28, %29 : vector<1x128xf32>
    %c0_25 = arith.constant 0 : index
    %c0_26 = arith.constant 0 : index
    %31 = vector.load %arg6[%c0_25, %c0_26] : memref<1x128xf32, #tpu.memory_space<vmem>>, vector<1x128xf32>
    %cst_27 = arith.constant 9.99999974E-6 : f32
    %32 = vector.broadcast %cst_27 : f32 to vector<1x128xf32>
    %33 = arith.addf %30, %32 : vector<1x128xf32>
    %34 = math.rsqrt %33 : vector<1x128xf32>
    %35 = arith.mulf %31, %34 : vector<1x128xf32>
    %36 = vector.broadcast %35 : vector<1x128xf32> to vector<32x128xf32>
    %37 = arith.mulf %21, %36 : vector<32x128xf32>
    %c0_28 = arith.constant 0 : index
    %c0_29 = arith.constant 0 : index
    %38 = vector.load %arg7[%c0_28, %c0_29] : memref<1x128xf32, #tpu.memory_space<vmem>>, vector<1x128xf32>
    %39 = vector.broadcast %38 : vector<1x128xf32> to vector<32x128xf32>
    %40 = arith.addf %37, %39 : vector<32x128xf32>
    %cst_30 = arith.constant 0.000000e+00 : f32
    %41 = vector.broadcast %cst_30 : f32 to vector<32x128xf32>
    %42 = arith.maximumf %40, %41 : vector<32x128xf32>
    %c0_31 = arith.constant 0 : index
    %c0_32 = arith.constant 0 : index
    %43 = vector.load %arg8[%c0_31, %c0_32] : memref<32x128xf32, #tpu.memory_space<vmem>>, vector<32x128xf32>
    tpu.vector_store %arg8[%c0_31, %c0_32], %42 {strides = array<i32>} : memref<32x128xf32, #tpu.memory_space<vmem>>, vector<32x128xf32>,
    return
  }
}

</mosaic_0001>

<llo_original>
// kernel: tile.27
$region0: #{tile.27}
  %s0 = inlined_call_operand.vmem [shape: f32[8,16,8], index: 0, kind: input, shape index: {}]
  %s1 = inlined_call_operand.vmem [shape: f32[8,128], index: 1, kind: output, shape index: {}]
  %s2 = smov 3
  %v3 = vld [vmem:[%s0] ss:$16 sm:%s2]
  %s4 = smov 12
  %v5 = vld [vmem:[%s0] ss:$16 sm:%s4]
  %vm6 = vcmask 1043458
  %v7 = vsel %vm6, %v5, %v3
  %s8 = smov 48
  %v9 = vld [vmem:[%s0] ss:$16 sm:%s8]
  %vm10 = vcmask 1045508
  %v11 = vsel %vm10, %v9, %v7
  %s12 = smov 192
  %v13 = vld [vmem:[%s0] ss:$16 sm:%s12]
  %vm14 = vcmask 1047558
  %v15 = vsel %vm14, %v13, %v11
  %vm16 = vcmask 64512
  %17 = vst.msk [vmem:[%s1] sm:$0xff] %vm16, %v15
  %s18 = scalar_lea.vmem %s0, 15
  %s19 = smov 3
  %v20 = vld [vmem:[%s18] ss:$16 sm:%s19]
  %s21 = scalar_lea.vmem %s0, 15
  %s22 = smov 12
  %v23 = vld [vmem:[%s21] ss:$16 sm:%s22]
  %vm24 = vcmask 1043458
  %v25 = vsel %vm24, %v23, %v20
  %s26 = scalar_lea.vmem %s0, 15
  %s27 = smov 48
  %v28 = vld [vmem:[%s26] ss:$16 sm:%s27]
  %vm29 = vcmask 1045508
  %v30 = vsel %vm29, %v28, %v25
  %s31 = scalar_lea.vmem %s0, 15
  %s32 = smov 192
  %v33 = vld [vmem:[%s31] ss:$16 sm:%s32]
  %vm34 = vcmask 1047558
  %v35 = vsel %vm34, %v33, %v30
  %36 = vrot.lane.b32.xlu0 %v35, 120
  %v37 = vpop.permute.xlu0 %36
  %vm38 = vcmask 1048512
  %39 = vst.msk [vmem:[%s1] sm:$0xff] %vm38, %v37
  %s40 = scalar_lea.vmem %s0, 14
  %s41 = smov 3
  %v42 = vld [vmem:[%s40] ss:$16 sm:%s41]
  %s43 = scalar_lea.vmem %s0, 14
  %s44 = smov 12
  %v45 = vld [vmem:[%s43] ss:$16 sm:%s44]
  %vm46 = vcmask 1043458
  %v47 = vsel %vm46, %v45, %v42
  %s48 = scalar_lea.vmem %s0, 14
  %s49 = smov 48
  %v50 = vld [vmem:[%s48] ss:$16 sm:%s49]
  %vm51 = vcmask 1045508
  %v52 = vsel %vm51, %v50, %v47
  %s53 = scalar_lea.vmem %s0, 14
  %s54 = smov 192
  %v55 = vld [vmem:[%s53] ss:$16 sm:%s54]
  %vm56 = vcmask 1047558
  %v57 = vsel %vm56, %v55, %v52
  %58 = vrot.lane.b32.xlu0 %v57, 112
  %v59 = vpop.permute.xlu0 %58
  %vm60 = vcmask 982912
  %61 = vst.msk [vmem:[%s1] sm:$0xff] %vm60, %v59
  %s62 = scalar_lea.vmem %s0, 13
  %s63 = smov 3
  %v64 = vld [vmem:[%s62] ss:$16 sm:%s63]
  %s65 = scalar_lea.vmem %s0, 13
  %s66 = smov 12
  %v67 = vld [vmem:[%s65] ss:$16 sm:%s66]
  %vm68 = vcmask 1043458
  %v69 = vsel %vm68, %v67, %v64
  %s70 = scalar_lea.vmem %s0, 13
  %s71 = smov 48
  %v72 = vld [vmem:[%s70] ss:$16 sm:%s71]
  %vm73 = vcmask 1045508
  %v74 = vsel %vm73, %v72, %v69
  %s75 = scalar_lea.vmem %s0, 13
  %s76 = smov 192
  %v77 = vld [vmem:[%s75] ss:$16 sm:%s76]
  %vm78 = vcmask 1047558
  %v79 = vsel %vm78, %v77, %v74
  %80 = vrot.lane.b32.xlu0 %v79, 104
  %v81 = vpop.permute.xlu0 %80
  %vm82 = vcmask 917312
  %83 = vst.msk [vmem:[%s1] sm:$0xff] %vm82, %v81
  %s84 = scalar_lea.vmem %s0, 12
  %s85 = smov 3
  %v86 = vld [vmem:[%s84] ss:$16 sm:%s85]
  %s87 = scalar_lea.vmem %s0, 12
  %s88 = smov 12
  %v89 = vld [vmem:[%s87] ss:$16 sm:%s88]
  %vm90 = vcmask 1043458
  %v91 = vsel %vm90, %v89, %v86
  %s92 = scalar_lea.vmem %s0, 12
  %s93 = smov 48
  %v94 = vld [vmem:[%s92] ss:$16 sm:%s93]
  %vm95 = vcmask 1045508
  %v96 = vsel %vm95, %v94, %v91
  %s97 = scalar_lea.vmem %s0, 12
  %s98 = smov 192
  %v99 = vld [vmem:[%s97] ss:$16 sm:%s98]
  %vm100 = vcmask 1047558
  %v101 = vsel %vm100, %v99, %v96
  %102 = vrot.lane.b32.xlu0 %v101, 96
  %v103 = vpop.permute.xlu0 %102
  %vm104 = vcmask 851712
  %105 = vst.msk [vmem:[%s1] sm:$0xff] %vm104, %v103
  %s106 = scalar_lea.vmem %s0, 11
  %s107 = smov 3
  %v108 = vld [vmem:[%s106] ss:$16 sm:%s107]
  %s109 = scalar_lea.vmem %s0, 11
  %s110 = smov 12
  %v111 = vld [vmem:[%s109] ss:$16 sm:%s110]
  %vm112 = vcmask 1043458
  %v113 = vsel %vm112, %v111, %v108
  %s114 = scalar_lea.vmem %s0, 11
  %s115 = smov 48
  %v116 = vld [vmem:[%s114] ss:$16 sm:%s115]
  %vm117 = vcmask 1045508
  %v118 = vsel %vm117, %v116, %v113
  %s119 = scalar_lea.vmem %s0, 11
  %s120 = smov 192
  %v121 = vld [vmem:[%s119] ss:$16 sm:%s120]
  %vm122 = vcmask 1047558
  %v123 = vsel %vm122, %v121, %v118
  %124 = vrot.lane.b32.xlu0 %v123, 88
  %v125 = vpop.permute.xlu0 %124
  %vm126 = vcmask 786112
  %127 = vst.msk [vmem:[%s1] sm:$0xff] %vm126, %v125
  %s128 = scalar_lea.vmem %s0, 10
  %s129 = smov 3
  %v130 = vld [vmem:[%s128] ss:$16 sm:%s129]
  %s131 = scalar_lea.vmem %s0, 10
  %s132 = smov 12
  %v133 = vld [vmem:[%s131] ss:$16 sm:%s132]
  %vm134 = vcmask 1043458
  %v135 = vsel %vm134, %v133, %v130
  %s136 = scalar_lea.vmem %s0, 10
  %s137 = smov 48
  %v138 = vld [vmem:[%s136] ss:$16 sm:%s137]
  %vm139 = vcmask 1045508
  %v140 = vsel %vm139, %v138, %v135
  %s141 = scalar_lea.vmem %s0, 10
  %s142 = smov 192
  %v143 = vld [vmem:[%s141] ss:$16 sm:%s142]
  %vm144 = vcmask 1047558
  %v145 = vsel %vm144, %v143, %v140
  %146 = vrot.lane.b32.xlu0 %v145, 80
  %v147 = vpop.permute.xlu0 %146
  %vm148 = vcmask 720512
  %149 = vst.msk [vmem:[%s1] sm:$0xff] %vm148, %v147
  %s150 = scalar_lea.vmem %s0, 9
  %s151 = smov 3
  %v152 = vld [vmem:[%s150] ss:$16 sm:%s151]
  %s153 = scalar_lea.vmem %s0, 9
  %s154 = smov 12
  %v155 = vld [vmem:[%s153] ss:$16 sm:%s154]
  %vm156 = vcmask 1043458
  %v157 = vsel %vm156, %v155, %v152
  %s158 = scalar_lea.vmem %s0, 9
  %s159 = smov 48
  %v160 = vld [vmem:[%s158] ss:$16 sm:%s159]
  %vm161 = vcmask 1045508
  %v162 = vsel %vm161, %v160, %v157
  %s163 = scalar_lea.vmem %s0, 9
  %s164 = smov 192
  %v165 = vld [vmem:[%s163] ss:$16 sm:%s164]
  %vm166 = vcmask 1047558
  %v167 = vsel %vm166, %v165, %v162
  %168 = vrot.lane.b32.xlu0 %v167, 72
  %v169 = vpop.permute.xlu0 %168
  %vm170 = vcmask 654912
  %171 = vst.msk [vmem:[%s1] sm:$0xff] %vm170, %v169
  %s172 = scalar_lea.vmem %s0, 8
  %s173 = smov 3
  %v174 = vld [vmem:[%s172] ss:$16 sm:%s173]
  %s175 = scalar_lea.vmem %s0, 8
  %s176 = smov 12
  %v177 = vld [vmem:[%s175] ss:$16 sm:%s176]
  %vm178 = vcmask 1043458
  %v179 = vsel %vm178, %v177, %v174
  %s180 = scalar_lea.vmem %s0, 8
  %s181 = smov 48
  %v182 = vld [vmem:[%s180] ss:$16 sm:%s181]
  %vm183 = vcmask 1045508
  %v184 = vsel %vm183, %v182, %v179
  %s185 = scalar_lea.vmem %s0, 8
  %s186 = smov 192
  %v187 = vld [vmem:[%s185] ss:$16 sm:%s186]
  %vm188 = vcmask 1047558
  %v189 = vsel %vm188, %v187, %v184
  %190 = vrot.lane.b32.xlu0 %v189, 64
  %v191 = vpop.permute.xlu0 %190
  %vm192 = vcmask 589312
  %193 = vst.msk [vmem:[%s1] sm:$0xff] %vm192, %v191
  %s194 = scalar_lea.vmem %s0, 7
  %s195 = smov 3
  %v196 = vld [vmem:[%s194] ss:$16 sm:%s195]
  %s197 = scalar_lea.vmem %s0, 7
  %s198 = smov 12
  %v199 = vld [vmem:[%s197] ss:$16 sm:%s198]
  %vm200 = vcmask 1043458
  %v201 = vsel %vm200, %v199, %v196
  %s202 = scalar_lea.vmem %s0, 7
  %s203 = smov 48
  %v204 = vld [vmem:[%s202] ss:$16 sm:%s203]
  %vm205 = vcmask 1045508
  %v206 = vsel %vm205, %v204, %v201
  %s207 = scalar_lea.vmem %s0, 7
  %s208 = smov 192
  %v209 = vld [vmem:[%s207] ss:$16 sm:%s208]
  %vm210 = vcmask 1047558
  %v211 = vsel %vm210, %v209, %v206
  %212 = vrot.lane.b32.xlu0 %v211, 56
  %v213 = vpop.permute.xlu0 %212
  %vm214 = vcmask 523712
  %215 = vst.msk [vmem:[%s1] sm:$0xff] %vm214, %v213
  %s216 = scalar_lea.vmem %s0, 6
  %s217 = smov 3
  %v218 = vld [vmem:[%s216] ss:$16 sm:%s217]
  %s219 = scalar_lea.vmem %s0, 6
  %s220 = smov 12
  %v221 = vld [vmem:[%s219] ss:$16 sm:%s220]
  %vm222 = vcmask 1043458
  %v223 = vsel %vm222, %v221, %v218
  %s224 = scalar_lea.vmem %s0, 6
  %s225 = smov 48
  %v226 = vld [vmem:[%s224] ss:$16 sm:%s225]
  %vm227 = vcmask 1045508
  %v228 = vsel %vm227, %v226, %v223
  %s229 = scalar_lea.vmem %s0, 6
  %s230 = smov 192
  %v231 = vld [vmem:[%s229] ss:$16 sm:%s230]
  %vm232 = vcmask 1047558
  %v233 = vsel %vm232, %v231, %v228
  %234 = vrot.lane.b32.xlu0 %v233, 48
  %v235 = vpop.permute.xlu0 %234
  %vm236 = vcmask 458112
  %237 = vst.msk [vmem:[%s1] sm:$0xff] %vm236, %v235
  %s238 = scalar_lea.vmem %s0, 5
  %s239 = smov 3
  %v240 = vld [vmem:[%s238] ss:$16 sm:%s239]
  %s241 = scalar_lea.vmem %s0, 5
  %s242 = smov 12
  %v243 = vld [vmem:[%s241] ss:$16 sm:%s242]
  %vm244 = vcmask 1043458
  %v245 = vsel %vm244, %v243, %v240
  %s246 = scalar_lea.vmem %s0, 5
  %s247 = smov 48
  %v248 = vld [vmem:[%s246] ss:$16 sm:%s247]
  %vm249 = vcmask 1045508
  %v250 = vsel %vm249, %v248, %v245
  %s251 = scalar_lea.vmem %s0, 5
  %s252 = smov 192
  %v253 = vld [vmem:[%s251] ss:$16 sm:%s252]
  %vm254 = vcmask 1047558
  %v255 = vsel %vm254, %v253, %v250
  %256 = vrot.lane.b32.xlu0 %v255, 40
  %v257 = vpop.permute.xlu0 %256
  %vm258 = vcmask 392512
  %259 = vst.msk [vmem:[%s1] sm:$0xff] %vm258, %v257
  %s260 = scalar_lea.vmem %s0, 4
  %s261 = smov 3
  %v262 = vld [vmem:[%s260] ss:$16 sm:%s261]
  %s263 = scalar_lea.vmem %s0, 4
  %s264 = smov 12
  %v265 = vld [vmem:[%s263] ss:$16 sm:%s264]
  %vm266 = vcmask 1043458
  %v267 = vsel %vm266, %v265, %v262
  %s268 = scalar_lea.vmem %s0, 4
  %s269 = smov 48
  %v270 = vld [vmem:[%s268] ss:$16 sm:%s269]
  %vm271 = vcmask 1045508
  %v272 = vsel %vm271, %v270, %v267
  %s273 = scalar_lea.vmem %s0, 4
  %s274 = smov 192
  %v275 = vld [vmem:[%s273] ss:$16 sm:%s274]
  %vm276 = vcmask 1047558
  %v277 = vsel %vm276, %v275, %v272
  %278 = vrot.lane.b32.xlu0 %v277, 32
  %v279 = vpop.permute.xlu0 %278
  %vm280 = vcmask 326912
  %281 = vst.msk [vmem:[%s1] sm:$0xff] %vm280, %v279
  %s282 = scalar_lea.vmem %s0, 3
  %s283 = smov 3
  %v284 = vld [vmem:[%s282] ss:$16 sm:%s283]
  %s285 = scalar_lea.vmem %s0, 3
  %s286 = smov 12
  %v287 = vld [vmem:[%s285] ss:$16 sm:%s286]
  %vm288 = vcmask 1043458
  %v289 = vsel %vm288, %v287, %v284
  %s290 = scalar_lea.vmem %s0, 3
  %s291 = smov 48
  %v292 = vld [vmem:[%s290] ss:$16 sm:%s291]
  %vm293 = vcmask 1045508
  %v294 = vsel %vm293, %v292, %v289
  %s295 = scalar_lea.vmem %s0, 3
  %s296 = smov 192
  %v297 = vld [vmem:[%s295] ss:$16 sm:%s296]
  %vm298 = vcmask 1047558
  %v299 = vsel %vm298, %v297, %v294
  %300 = vrot.lane.b32.xlu0 %v299, 24
  %v301 = vpop.permute.xlu0 %300
  %vm302 = vcmask 261312
  %303 = vst.msk [vmem:[%s1] sm:$0xff] %vm302, %v301
  %s304 = scalar_lea.vmem %s0, 2
  %s305 = smov 3
  %v306 = vld [vmem:[%s304] ss:$16 sm:%s305]
  %s307 = scalar_lea.vmem %s0, 2
  %s308 = smov 12
  %v309 = vld [vmem:[%s307] ss:$16 sm:%s308]
  %vm310 = vcmask 1043458
  %v311 = vsel %vm310, %v309, %v306
  %s312 = scalar_lea.vmem %s0, 2
  %s313 = smov 48
  %v314 = vld [vmem:[%s312] ss:$16 sm:%s313]
  %vm315 = vcmask 1045508
  %v316 = vsel %vm315, %v314, %v311
  %s317 = scalar_lea.vmem %s0, 2
  %s318 = smov 192
  %v319 = vld [vmem:[%s317] ss:$16 sm:%s318]
  %vm320 = vcmask 1047558
  %v321 = vsel %vm320, %v319, %v316
  %322 = vrot.lane.b32.xlu0 %v321, 16
  %v323 = vpop.permute.xlu0 %322
  %vm324 = vcmask 195712
  %325 = vst.msk [vmem:[%s1] sm:$0xff] %vm324, %v323
  %s326 = scalar_lea.vmem %s0, 1
  %s327 = smov 3
  %v328 = vld [vmem:[%s326] ss:$16 sm:%s327]
  %s329 = scalar_lea.vmem %s0, 1
  %s330 = smov 12
  %v331 = vld [vmem:[%s329] ss:$16 sm:%s330]
  %vm332 = vcmask 1043458
  %v333 = vsel %vm332, %v331, %v328
  %s334 = scalar_lea.vmem %s0, 1
  %s335 = smov 48
  %v336 = vld [vmem:[%s334] ss:$16 sm:%s335]
  %vm337 = vcmask 1045508
  %v338 = vsel %vm337, %v336, %v333
  %s339 = scalar_lea.vmem %s0, 1
  %s340 = smov 192
  %v341 = vld [vmem:[%s339] ss:$16 sm:%s340]
  %vm342 = vcmask 1047558
  %v343 = vsel %vm342, %v341, %v338
  %344 = vrot.lane.b32.xlu0 %v343, 8
  %v345 = vpop.permute.xlu0 %344
  %vm346 = vcmask 130112
  %347 = vst.msk [vmem:[%s1] sm:$0xff] %vm346, %v345

// kernel: conv_relu_bn.1
$region0: #{conv_relu_bn.1}
  #allocation0 [shape = 'u32[]', space=smem, size = 0x4, offset = 0x4, fixed_abs, tag = 'smem constant byte address 0x4 - core index']
  #allocation1 [shape = 'u32[72,128]{1,0:T(1,128)}', space=vmem, size = 0x9000, scoped, tag = 'internal scratch']
  %s0 = inlined_call_operand.vmem [shape: f32[32,64], index: 0, kind: input, shape index: {}]
  %s1 = inlined_call_operand.vmem [shape: f32[64,384], index: 1, kind: input, shape index: {}]
  %s2 = inlined_call_operand.vmem [shape: f32[32,32], index: 2, kind: input, shape index: {}]
  %s3 = inlined_call_operand.vmem [shape: f32[32,32], index: 3, kind: input, shape index: {}]
  %s4 = inlined_call_operand.vmem [shape: f32[128,8], index: 4, kind: input, shape index: {}]
  %s5 = inlined_call_operand.vmem [shape: f32[8,128], index: 5, kind: input, shape index: {}]
  %s6 = inlined_call_operand.vmem [shape: f32[1,128], index: 6, kind: input, shape index: {}]
  %s7 = inlined_call_operand.vmem [shape: f32[1,128], index: 7, kind: input, shape index: {}]
  %s8 = inlined_call_operand.vmem [shape: f32[32,128], index: 8, kind: output, shape index: {}]
  %s9 = sld [smem:[#allocation0]]
  $region42: #{conv_relu_bn.1} parent=0
    _
  %s11 = ssub.s32 1, %s9
  %s12 = scalar_select 0, %s11, %s9
  // Predicated region
  $region2: #{conv_relu_bn.1} parent=0 // pred_check
    _
  $region3: #{conv_relu_bn.1} parent=0 // pred_check_branch
    %14 = sbr.rel (0) target = $region5
  $region4: #{conv_relu_bn.1} parent=0 // pred_region
    _
  $region5: #{conv_relu_bn.1} parent=0 // pred_fallthru
    _
  // Predicated region
  $region6: #{conv_relu_bn.1} parent=0 // pred_check
    _
  $region7: #{conv_relu_bn.1} parent=0 // pred_check_branch
    %16 = sbr.rel (0) target = $region9
  $region8: #{conv_relu_bn.1} parent=0 // pred_region
    _
  $region9: #{conv_relu_bn.1} parent=0 // pred_fallthru
    _
  // Predicated region
  $region10: #{conv_relu_bn.1} parent=0 // pred_check
    _
  $region11: #{conv_relu_bn.1} parent=0 // pred_check_branch
    %18 = sbr.rel (0) target = $region13
  $region12: #{conv_relu_bn.1} parent=0 // pred_region
    _
  $region13: #{conv_relu_bn.1} parent=0 // pred_fallthru
    _
  // Predicated region
  $region14: #{conv_relu_bn.1} parent=0 // pred_check
    _
  $region15: #{conv_relu_bn.1} parent=0 // pred_check_branch
    %20 = sbr.rel (0) target = $region17
  $region16: #{conv_relu_bn.1} parent=0 // pred_region
    _
  $region17: #{conv_relu_bn.1} parent=0 // pred_fallthru
    _
  // Predicated region
  $region18: #{conv_relu_bn.1} parent=0 // pred_check
    _
  $region19: #{conv_relu_bn.1} parent=0 // pred_check_branch
    %22 = sbr.rel (0) target = $region21
  $region20: #{conv_relu_bn.1} parent=0 // pred_region
    _
  $region21: #{conv_relu_bn.1} parent=0 // pred_fallthru
    _
  // Predicated region
  $region22: #{conv_relu_bn.1} parent=0 // pred_check
    _
  $region23: #{conv_relu_bn.1} parent=0 // pred_check_branch
    %24 = sbr.rel (0) target = $region25
  $region24: #{conv_relu_bn.1} parent=0 // pred_region
    _
  $region25: #{conv_relu_bn.1} parent=0 // pred_fallthru
    _
  // Predicated region
  $region26: #{conv_relu_bn.1} parent=0 // pred_check
    _
  $region27: #{conv_relu_bn.1} parent=0 // pred_check_branch
    %26 = sbr.rel (0) target = $region29
  $region28: #{conv_relu_bn.1} parent=0 // pred_region
    _
  $region29: #{conv_relu_bn.1} parent=0 // pred_fallthru
    _
  // Predicated region
  $region30: #{conv_relu_bn.1} parent=0 // pred_check
    _
  $region31: #{conv_relu_bn.1} parent=0 // pred_check_branch
    %28 = sbr.rel (0) target = $region33
  $region32: #{conv_relu_bn.1} parent=0 // pred_region
    _
  $region33: #{conv_relu_bn.1} parent=0 // pred_fallthru
    _
  %v29 = vld [vmem:[%s0] sm:$0xff]
  %v30 = vld [vmem:[%s0 + $0x8] sm:$0xff]
  %v31 = vld [vmem:[%s0 + $0x10] sm:$0xff]
  %v32 = vld [vmem:[%s0 + $0x18] sm:$0xff]
  %v33 = vld [vmem:[%s1] sm:$0xff]
  %v34 = vld [vmem:[%s1 + $0x8] sm:$0xff]
  %v35 = vld [vmem:[%s1 + $0x10] sm:$0xff]
  %v36 = vld [vmem:[%s1 + $0x18] sm:$0xff]
  %v37 = vld [vmem:[%s1 + $0x20] sm:$0xff]
  %v38 = vld [vmem:[%s1 + $0x28] sm:$0xff]
  %v39 = vld [vmem:[%s1 + $0x30] sm:$0xff]
  %v40 = vld [vmem:[%s1 + $0x38] sm:$0xff]
  %v41 = vld [vmem:[%s1 + $0x40] sm:$0xff]
  %v42 = vld [vmem:[%s1 + $0x48] sm:$0xff]
  %v43 = vld [vmem:[%s1 + $0x50] sm:$0xff]
  %v44 = vld [vmem:[%s1 + $0x58] sm:$0xff]
  %v45 = vld [vmem:[%s1 + $0x60] sm:$0xff]
  %v46 = vld [vmem:[%s1 + $0x68] sm:$0xff]
  %v47 = vld [vmem:[%s1 + $0x70] sm:$0xff]
  %v48 = vld [vmem:[%s1 + $0x78] sm:$0xff]
  %v49 = vld [vmem:[%s1 + $0x80] sm:$0xff]
  %v50 = vld [vmem:[%s1 + $0x88] sm:$0xff]
  %v51 = vld [vmem:[%s1 + $0x90] sm:$0xff]
  %v52 = vld [vmem:[%s1 + $0x98] sm:$0xff]
  %v53 = vld [vmem:[%s1 + $0xa0] sm:$0xff]
  %v54 = vld [vmem:[%s1 + $0xa8] sm:$0xff]
  %v55 = vld [vmem:[%s1 + $0xb0] sm:$0xff]
  %v56 = vld [vmem:[%s1 + $0xb8] sm:$0xff]
  %vm57 = vcmask 523264
  %v59 = vsel %vm57, %v29, 0
  %v62 = vsel %vm57, %v30, 0
  %v65 = vsel %vm57, %v31, 0
  %v68 = vsel %vm57, %v32, 0
  %70 = vmatpush.msra.mxu0 0.0
  %71 = vmatpush.msra.mxu0 0.0
  %72 = vmatpush.msra.mxu0 0.0
  %73 = vmatpush.msra.mxu0 0.0
  %74 = vmatpush.msra.mxu0 0.0
  %75 = vmatpush.msra.mxu0 0.0
  %76 = vmatpush.msra.mxu0 0.0
  %77 = vmatpush.msra.mxu0 0.0
  %78 = vmatpush.msra.mxu0 %v54
  %79 = vmatpush.msra.mxu0 %v51
  %80 = vmatpush.msra.mxu0 %v48
  %81 = vmatpush.msra.mxu0 %v45
  %82 = vmatpush.msra.mxu0 %v42
  %83 = vmatpush.msra.mxu0 %v39
  %84 = vmatpush.msra.mxu0 %v36
  %85 = vmatpush.msra.mxu0 %v33
  %86 = vmatmul.f32.gmra.mxu0 %v59
  %v87 = vpop.f32.mrf.mxu0
  %v88 = vadd.f32 0.0, %v87
  %89 = vmatmul.f32.gmra.mxu0 %v62
  %v90 = vpop.f32.mrf.mxu0
  %v91 = vadd.f32 0.0, %v90
  %92 = vmatmul.f32.gmra.mxu0 %v65
  %v93 = vpop.f32.mrf.mxu0
  %v94 = vadd.f32 0.0, %v93
  %95 = vmatmul.f32.gmra.mxu0 %v68
  %v96 = vpop.f32.mrf.mxu0
  %v97 = vadd.f32 0.0, %v96
  %98 = vdwg.mxu0
  %99 = vmatpush.msra.mxu0 0.0
  %100 = vmatpush.msra.mxu0 0.0
  %101 = vmatpush.msra.mxu0 0.0
  %102 = vmatpush.msra.mxu0 0.0
  %103 = vmatpush.msra.mxu0 0.0
  %104 = vmatpush.msra.mxu0 0.0
  %105 = vmatpush.msra.mxu0 0.0
  %106 = vmatpush.msra.mxu0 0.0
  %107 = vmatpush.msra.mxu0 %v55
  %108 = vmatpush.msra.mxu0 %v52
  %109 = vmatpush.msra.mxu0 %v49
  %110 = vmatpush.msra.mxu0 %v46
  %111 = vmatpush.msra.mxu0 %v43
  %112 = vmatpush.msra.mxu0 %v40
  %113 = vmatpush.msra.mxu0 %v37
  %114 = vmatpush.msra.mxu0 %v34
  %115 = vmatmul.f32.gmra.mxu0 %v59
  %v116 = vpop.f32.mrf.mxu0
  %v117 = vadd.f32 0.0, %v116
  %118 = vmatmul.f32.gmra.mxu0 %v62
  %v119 = vpop.f32.mrf.mxu0
  %v120 = vadd.f32 0.0, %v119
  %121 = vmatmul.f32.gmra.mxu0 %v65
  %v122 = vpop.f32.mrf.mxu0
  %v123 = vadd.f32 0.0, %v122
  %124 = vmatmul.f32.gmra.mxu0 %v68
  %v125 = vpop.f32.mrf.mxu0
  %v126 = vadd.f32 0.0, %v125
  %127 = vdwg.mxu0
  %128 = vmatpush.msra.mxu0 0.0
  %129 = vmatpush.msra.mxu0 0.0
  %130 = vmatpush.msra.mxu0 0.0
  %131 = vmatpush.msra.mxu0 0.0
  %132 = vmatpush.msra.mxu0 0.0
  %133 = vmatpush.msra.mxu0 0.0
  %134 = vmatpush.msra.mxu0 0.0
  %135 = vmatpush.msra.mxu0 0.0
  %136 = vmatpush.msra.mxu0 %v56
  %137 = vmatpush.msra.mxu0 %v53
  %138 = vmatpush.msra.mxu0 %v50
  %139 = vmatpush.msra.mxu0 %v47
  %140 = vmatpush.msra.mxu0 %v44
  %141 = vmatpush.msra.mxu0 %v41
  %142 = vmatpush.msra.mxu0 %v38
  %143 = vmatpush.msra.mxu0 %v35
  %144 = vmatmul.f32.gmra.mxu0 %v59
  %v145 = vpop.f32.mrf.mxu0
  %v146 = vadd.f32 0.0, %v145
  %147 = vmatmul.f32.gmra.mxu0 %v62
  %v148 = vpop.f32.mrf.mxu0
  %v149 = vadd.f32 0.0, %v148
  %150 = vmatmul.f32.gmra.mxu0 %v65
  %v151 = vpop.f32.mrf.mxu0
  %v152 = vadd.f32 0.0, %v151
  %153 = vmatmul.f32.gmra.mxu0 %v68
  %v154 = vpop.f32.mrf.mxu0
  %v155 = vadd.f32 0.0, %v154
  %156 = vdwg.mxu0
  %v157 = vld [vmem:[%s2] sm:$0xff]
  %v158 = vld [vmem:[%s2 + $0x8] sm:$0xff]
  %v159 = vld [vmem:[%s2 + $0x10] sm:$0xff]
  %v160 = vld [vmem:[%s2 + $0x18] sm:$0xff]
  %vm161 = vcmask 261120
  %v163 = vsel %vm161, %v157, 0
  %v166 = vsel %vm161, %v158, 0
  %v169 = vsel %vm161, %v159, 0
  %v172 = vsel %vm161, %v160, 0
  %174 = vmatpush.msra.mxu0 0.0
  %175 = vmatpush.msra.mxu0 0.0
  %176 = vmatpush.msra.mxu0 0.0
  %177 = vmatpush.msra.mxu0 0.0
  %178 = vmatpush.msra.mxu0 0.0
  %179 = vmatpush.msra.mxu0 0.0
  %180 = vmatpush.msra.mxu0 0.0
  %181 = vmatpush.msra.mxu0 0.0
  %182 = vmatpush.msra.mxu0 0.0
  %183 = vmatpush.msra.mxu0 0.0
  %184 = vmatpush.msra.mxu0 0.0
  %185 = vmatpush.msra.mxu0 0.0
  %186 = vmatpush.msra.mxu0 %v97
  %187 = vmatpush.msra.mxu0 %v94
  %188 = vmatpush.msra.mxu0 %v91
  %189 = vmatpush.msra.mxu0 %v88
  %190 = vmatmul.f32.gmra.mxu0 %v163
  %v191 = vpop.f32.mrf.mxu0
  %v192 = vadd.f32 %v117, %v191
  %193 = vmatmul.f32.gmra.mxu0 %v166
  %v194 = vpop.f32.mrf.mxu0
  %v195 = vadd.f32 %v120, %v194
  %196 = vmatmul.f32.gmra.mxu0 %v169
  %v197 = vpop.f32.mrf.mxu0
  %v198 = vadd.f32 %v123, %v197
  %199 = vmatmul.f32.gmra.mxu0 %v172
  %v200 = vpop.f32.mrf.mxu0
  %v201 = vadd.f32 %v126, %v200
  %202 = vdwg.mxu0
  %v203 = vld [vmem:[%s3] sm:$0xff]
  %v204 = vld [vmem:[%s3 + $0x8] sm:$0xff]
  %v205 = vld [vmem:[%s3 + $0x10] sm:$0xff]
  %v206 = vld [vmem:[%s3 + $0x18] sm:$0xff]
  %v208 = vsel %vm161, %v203, 0
  %v211 = vsel %vm161, %v204, 0
  %v214 = vsel %vm161, %v205, 0
  %v217 = vsel %vm161, %v206, 0
  %219 = vmatpush.msra.mxu0 0.0
  %220 = vmatpush.msra.mxu0 0.0
  %221 = vmatpush.msra.mxu0 0.0
  %222 = vmatpush.msra.mxu0 0.0
  %223 = vmatpush.msra.mxu0 0.0
  %224 = vmatpush.msra.mxu0 0.0
  %225 = vmatpush.msra.mxu0 0.0
  %226 = vmatpush.msra.mxu0 0.0
  %227 = vmatpush.msra.mxu0 0.0
  %228 = vmatpush.msra.mxu0 0.0
  %229 = vmatpush.msra.mxu0 0.0
  %230 = vmatpush.msra.mxu0 0.0
  %231 = vmatpush.msra.mxu0 %v155
  %232 = vmatpush.msra.mxu0 %v152
  %233 = vmatpush.msra.mxu0 %v149
  %234 = vmatpush.msra.mxu0 %v146
  %235 = vmatmul.f32.gmra.mxu0 %v208
  %v236 = vpop.f32.mrf.mxu0
  %v237 = vadd.f32 0.0, %v236
  %238 = vmatmul.f32.gmra.mxu0 %v211
  %v239 = vpop.f32.mrf.mxu0
  %v240 = vadd.f32 0.0, %v239
  %241 = vmatmul.f32.gmra.mxu0 %v214
  %v242 = vpop.f32.mrf.mxu0
  %v243 = vadd.f32 0.0, %v242
  %244 = vmatmul.f32.gmra.mxu0 %v217
  %v245 = vpop.f32.mrf.mxu0
  %v246 = vadd.f32 0.0, %v245
  %247 = vdwg.mxu0
  %v248 = vadd.f32 %v192, %v237
  %v249 = vadd.f32 %v195, %v240
  %v250 = vadd.f32 %v198, %v243
  %v251 = vadd.f32 %v201, %v246
  %v252 = vadd.f32 %v248, %v249
  %v253 = vadd.f32 %v252, %v250
  %v254 = vadd.f32 %v253, %v251
  %v255 = vrot.slane %v254, 4
  %v256 = vadd.f32 %v254, %v255
  %v257 = vrot.slane %v256, 2
  %v258 = vadd.f32 %v256, %v257
  %v259 = vrot.slane %v258, 1
  %v260 = vadd.f32 %v258, %v259
  %v261 = vld [vmem:[%s4] sm:$0xff]
  %v262 = vld [vmem:[%s4 + $0x8] sm:$0xff]
  %v263 = vld [vmem:[%s4 + $0x10] sm:$0xff]
  %v264 = vld [vmem:[%s4 + $0x18] sm:$0xff]
  %v265 = vld [vmem:[%s4 + $0x20] sm:$0xff]
  %v266 = vld [vmem:[%s4 + $0x28] sm:$0xff]
  %v267 = vld [vmem:[%s4 + $0x30] sm:$0xff]
  %v268 = vld [vmem:[%s4 + $0x38] sm:$0xff]
  %v269 = vld [vmem:[%s4 + $0x40] sm:$0xff]
  %v270 = vld [vmem:[%s4 + $0x48] sm:$0xff]
  %v271 = vld [vmem:[%s4 + $0x50] sm:$0xff]
  %v272 = vld [vmem:[%s4 + $0x58] sm:$0xff]
  %v273 = vld [vmem:[%s4 + $0x60] sm:$0xff]
  %v274 = vld [vmem:[%s4 + $0x68] sm:$0xff]
  %v275 = vld [vmem:[%s4 + $0x70] sm:$0xff]
  %v276 = vld [vmem:[%s4 + $0x78] sm:$0xff]
  %277 = vmatpush.msra.mxu0 %v276
  %278 = vmatpush.msra.mxu0 %v275
  %279 = vmatpush.msra.mxu0 %v274
  %280 = vmatpush.msra.mxu0 %v273
  %281 = vmatpush.msra.mxu0 %v272
  %282 = vmatpush.msra.mxu0 %v271
  %283 = vmatpush.msra.mxu0 %v270
  %284 = vmatpush.msra.mxu0 %v269
  %285 = vmatpush.msra.mxu0 %v268
  %286 = vmatpush.msra.mxu0 %v267
  %287 = vmatpush.msra.mxu0 %v266
  %288 = vmatpush.msra.mxu0 %v265
  %289 = vmatpush.msra.mxu0 %v264
  %290 = vmatpush.msra.mxu0 %v263
  %291 = vmatpush.msra.mxu0 %v262
  %292 = vmatpush.msra.mxu0 %v261
  %293 = vmatmul.f32.gmra.mxu0 %v260
  %v294 = vpop.f32.mrf.mxu0
  %v295 = vadd.f32 0.0, %v294
  %296 = vdwg.mxu0
  %v297 = vld [vmem:[%s5] sm:$0xff]
  %vm298 = vcmask 64512
  %v300 = vsel %vm298, %v295, 0
  %302 = vmatpush.msra.mxu0 0.0
  %303 = vmatpush.msra.mxu0 0.0
  %304 = vmatpush.msra.mxu0 0.0
  %305 = vmatpush.msra.mxu0 0.0
  %306 = vmatpush.msra.mxu0 0.0
  %307 = vmatpush.msra.mxu0 0.0
  %308 = vmatpush.msra.mxu0 0.0
  %309 = vmatpush.msra.mxu0 0.0
  %310 = vmatpush.msra.mxu0 0.0
  %311 = vmatpush.msra.mxu0 0.0
  %312 = vmatpush.msra.mxu0 0.0
  %313 = vmatpush.msra.mxu0 0.0
  %314 = vmatpush.msra.mxu0 0.0
  %315 = vmatpush.msra.mxu0 0.0
  %316 = vmatpush.msra.mxu0 0.0
  %317 = vmatpush.msra.mxu0 %v297
  %318 = vmatmul.f32.gmra.mxu0 %v300
  %v319 = vpop.f32.mrf.mxu0
  %v320 = vadd.f32 0.0, %v319
  %321 = vdwg.mxu0
  %v322 = vrcp.pop 512.0
  %v323 = vmul.f32 512.0, %v322
  %v324 = vsub.f32 1.0, %v323
  %v325 = vmul.f32 %v322, %v324
  %v326 = vadd.f32 %v322, %v325
  %vm327 = vweird.f32 %v322
  %v328 = vsel %vm327, %v322, %v326
  %v329 = vmul.f32 %v320, %v328
  %v330 = vperm.slane %v329, 0
  %v331 = vsub.f32 %v248, %v330
  %v332 = vsub.f32 %v249, %v330
  %v333 = vsub.f32 %v250, %v330
  %v334 = vsub.f32 %v251, %v330
  %v335 = vmul.f32 %v331, %v331
  %v336 = vmul.f32 %v332, %v332
  %v337 = vmul.f32 %v333, %v333
  %v338 = vmul.f32 %v334, %v334
  %v339 = vadd.f32 %v335, %v336
  %v340 = vadd.f32 %v339, %v337
  %v341 = vadd.f32 %v340, %v338
  %v342 = vrot.slane %v341, 4
  %v343 = vadd.f32 %v341, %v342
  %v344 = vrot.slane %v343, 2
  %v345 = vadd.f32 %v343, %v344
  %v346 = vrot.slane %v345, 1
  %v347 = vadd.f32 %v345, %v346
  %348 = vmatpush.msra.mxu0 %v276
  %349 = vmatpush.msra.mxu0 %v275
  %350 = vmatpush.msra.mxu0 %v274
  %351 = vmatpush.msra.mxu0 %v273
  %352 = vmatpush.msra.mxu0 %v272
  %353 = vmatpush.msra.mxu0 %v271
  %354 = vmatpush.msra.mxu0 %v270
  %355 = vmatpush.msra.mxu0 %v269
  %356 = vmatpush.msra.mxu0 %v268
  %357 = vmatpush.msra.mxu0 %v267
  %358 = vmatpush.msra.mxu0 %v266
  %359 = vmatpush.msra.mxu0 %v265
  %360 = vmatpush.msra.mxu0 %v264
  %361 = vmatpush.msra.mxu0 %v263
  %362 = vmatpush.msra.mxu0 %v262
  %363 = vmatpush.msra.mxu0 %v261
  %364 = vmatmul.f32.gmra.mxu0 %v347
  %v365 = vpop.f32.mrf.mxu0
  %v366 = vadd.f32 0.0, %v365
  %367 = vdwg.mxu0
  %v369 = vsel %vm298, %v366, 0
  %371 = vmatpush.msra.mxu0 0.0
  %372 = vmatpush.msra.mxu0 0.0
  %373 = vmatpush.msra.mxu0 0.0
  %374 = vmatpush.msra.mxu0 0.0
  %375 = vmatpush.msra.mxu0 0.0
  %376 = vmatpush.msra.mxu0 0.0
  %377 = vmatpush.msra.mxu0 0.0
  %378 = vmatpush.msra.mxu0 0.0
  %379 = vmatpush.msra.mxu0 0.0
  %380 = vmatpush.msra.mxu0 0.0
  %381 = vmatpush.msra.mxu0 0.0
  %382 = vmatpush.msra.mxu0 0.0
  %383 = vmatpush.msra.mxu0 0.0
  %384 = vmatpush.msra.mxu0 0.0
  %385 = vmatpush.msra.mxu0 0.0
  %386 = vmatpush.msra.mxu0 %v297
  %387 = vmatmul.f32.gmra.mxu0 %v369
  %v388 = vpop.f32.mrf.mxu0
  %v389 = vadd.f32 0.0, %v388
  %390 = vdwg.mxu0
  %v391 = vmul.f32 %v389, %v328
  %v392 = vld [vmem:[%s6] sm:$0x1]
  %v393 = vadd.f32 %v391, 1e-05
  %v394 = vrsqrt.pop %v393
  %v395 = vmul.f32 %v394, %v393
  %v396 = vmul.f32 %v395, %v394
  %v397 = vmul.f32 0.5, %v396
  %v398 = vsub.f32 1.5, %v397
  %v399 = vmul.f32 %v394, %v398
  %vm400 = vweird.f32 %v393
  %vm401 = vweird.f32 %v394
  %vm402 = vmor %vm400, %vm401
  %v403 = vsel %vm402, %v394, %v399
  %v404 = vmul.f32 %v392, %v403
  %v406 = vperm.slane %v404, 0
  %v408 = vmul.f32 %v331, %v406
  %v409 = vmul.f32 %v332, %v406
  %v410 = vmul.f32 %v333, %v406
  %v411 = vmul.f32 %v334, %v406
  %v412 = vld [vmem:[%s7] sm:$0x1]
  %v414 = vperm.slane %v412, 0
  %v416 = vadd.f32 %v408, %v414
  %v417 = vadd.f32 %v409, %v414
  %v418 = vadd.f32 %v410, %v414
  %v419 = vadd.f32 %v411, %v414
  %v420 = vmax.f32 %v416, 0.0
  %v421 = vmax.f32 %v417, 0.0
  %v422 = vmax.f32 %v418, 0.0
  %v423 = vmax.f32 %v419, 0.0
  %424 = vst [vmem:[%s8] sm:$0xff] %v420
  %425 = vst [vmem:[%s8 + $0x8] sm:$0xff] %v421
  %426 = vst [vmem:[%s8 + $0x10] sm:$0xff] %v422
  %427 = vst [vmem:[%s8 + $0x18] sm:$0xff] %v423
  // Predicated region
  $region34: #{conv_relu_bn.1} parent=0 // pred_check
    _
  $region35: #{conv_relu_bn.1} parent=0 // pred_check_branch
    %429 = sbr.rel (0) target = $region37
  $region36: #{conv_relu_bn.1} parent=0 // pred_region
    _
  $region37: #{conv_relu_bn.1} parent=0 // pred_fallthru
    _
  // Predicated region
  $region38: #{conv_relu_bn.1} parent=0 // pred_check
    _
  $region39: #{conv_relu_bn.1} parent=0 // pred_check_branch
    %431 = sbr.rel (0) target = $region41
  $region40: #{conv_relu_bn.1} parent=0 // pred_region
    _
  $region41: #{conv_relu_bn.1} parent=0 // pred_fallthru
    _

</llo_original>
